<compile_context>
chip_gen: v7x
topology: tpu7x:2x2x1
jax: 0.10.0
libtpu: 0.0.40
codegen_flags: <defaults>
</compile_context>

<pallas_src>
import functools
import math

import jax
import jax.numpy as jnp
from jax.experimental import pallas as pl
from jax.experimental.pallas import tpu as pltpu

NEG_INF = -1.0e9
LN_EPS = 1e-5
VMEM_LIMIT_BYTES = 32 * 1024 * 1024


def _cparams(sem):
    return pltpu.CompilerParams(dimension_semantics=sem,
                                vmem_limit_bytes=VMEM_LIMIT_BYTES)


def _pick_tile(dim, preferred, align):
    """Largest `align`-multiple tile <= preferred that divides dim (else full dim)."""
    if dim <= preferred:
        return dim
    t = (preferred // align) * align
    while t >= align:
        if dim % t == 0:
            return t
        t -= align
    return dim


# ----------------------------- Pallas kernels ------------------------------

def _fused_attn_kernel(x_ref, g_ref, bln_ref, wqkv_ref, wo_ref, m_ref, o_ref,
                       *, num_heads, inv_scale):
    """Pre-LN self-attention block for one batch element, fully fused.

    x_ref: (1, L, D) f32; wqkv_ref: (D, 3D) bf16; wo_ref: (D, D) bf16;
    m_ref: (1, 1, Lk) additive key-padding mask; o_ref: (1, L, D) f32 = x + attn.
    """
    x = x_ref[0]                                        # (L, D) f32
    D = x.shape[-1]
    dh = D // num_heads

    # LayerNorm (f32 VPU/EUP math), then one full-width QKV matmul in bf16.
    mu = jnp.mean(x, axis=-1, keepdims=True)
    var = jnp.mean((x - mu) ** 2, axis=-1, keepdims=True)
    xn = (x - mu) * jax.lax.rsqrt(var + LN_EPS) * g_ref[...] + bln_ref[...]
    qkv = jnp.dot(xn.astype(jnp.bfloat16), wqkv_ref[...],
                  preferred_element_type=jnp.float32)   # (L, 3D) f32

    m = m_ref[0]                                        # (1, Lk) additive mask
    ctx_heads = []
    for h in range(num_heads):                          # static per-head loop
        q = qkv[:, h * dh:(h + 1) * dh].astype(jnp.bfloat16)
        k = qkv[:, D + h * dh:D + (h + 1) * dh].astype(jnp.bfloat16)
        v = qkv[:, 2 * D + h * dh:2 * D + (h + 1) * dh].astype(jnp.bfloat16)
        s = jax.lax.dot_general(q, k, (((1,), (1,)), ((), ())),
                                preferred_element_type=jnp.float32)  # (Lq, Lk)
        s = s * inv_scale + m
        s = s - jnp.max(s, axis=-1, keepdims=True)
        p = jnp.exp(s)
        p = p * pl.reciprocal(jnp.sum(p, axis=-1, keepdims=True), approx=True)
        ctx_heads.append(jnp.dot(p.astype(jnp.bfloat16), v,
                                 preferred_element_type=jnp.float32))
    ctx = jnp.concatenate(ctx_heads, axis=-1)           # (L, D) lane-dense

    # Output projection (K = D full-width contraction) + residual, fused.
    o_ref[0] = x + jnp.dot(ctx.astype(jnp.bfloat16), wo_ref[...],
                           preferred_element_type=jnp.float32)


def _ln_linear_relu_kernel(x_ref, g_ref, bln_ref, w_ref, bias_ref, o_ref):
    # LayerNorm fused into the W1 matmul prologue; bf16 operands, f32 accum.
    x = x_ref[...]                                      # (tm, D) f32
    mu = jnp.mean(x, axis=-1, keepdims=True)
    var = jnp.mean((x - mu) ** 2, axis=-1, keepdims=True)
    xn = (x - mu) * jax.lax.rsqrt(var + LN_EPS) * g_ref[...] + bln_ref[...]
    y = jnp.dot(xn.astype(jnp.bfloat16), w_ref[...],
                preferred_element_type=jnp.float32) + bias_ref[...]
    o_ref[...] = jnp.maximum(y, 0.0).astype(o_ref.dtype)   # bf16 to HBM


def _linear_res_kernel(x_ref, w_ref, bias_ref, res_ref, o_ref):
    # Canonical tiled matmul with K-reduction; bias + residual fused into the
    # accumulator init; accumulate directly into the resident f32 output block.
    k = pl.program_id(2)

    @pl.when(k == 0)
    def _():
        o_ref[...] = res_ref[...] + bias_ref[...]

    o_ref[...] += jnp.dot(x_ref[...], w_ref[...],
                          preferred_element_type=jnp.float32)


# --------------------------- kernel call wrappers ---------------------------

def fused_attention_block(x, gamma, beta, wqkv, wo, mask_b1l, num_heads, inv_scale):
    B, L, D = x.shape
    kern = functools.partial(_fused_attn_kernel,
                             num_heads=num_heads, inv_scale=inv_scale)
    return pl.pallas_call(
        kern,
        out_shape=jax.ShapeDtypeStruct((B, L, D), jnp.float32),
        grid=(B,),
        in_specs=[pl.BlockSpec((1, L, D), lambda b: (b, 0, 0)),
                  pl.BlockSpec((1, D), lambda b: (0, 0)),
                  pl.BlockSpec((1, D), lambda b: (0, 0)),
                  pl.BlockSpec((D, 3 * D), lambda b: (0, 0)),
                  pl.BlockSpec((D, D), lambda b: (0, 0)),
                  pl.BlockSpec((1, 1, L), lambda b: (b, 0, 0))],
        out_specs=pl.BlockSpec((1, L, D), lambda b: (b, 0, 0)),
        compiler_params=_cparams(("parallel",)),
    )(x, gamma, beta, wqkv, wo, mask_b1l)


def ln_linear_relu(x2d, gamma, beta, w, bias):
    M, D = x2d.shape
    N = w.shape[1]
    tm = _pick_tile(M, 512, 8)
    tn = _pick_tile(N, 512, 128)
    return pl.pallas_call(
        _ln_linear_relu_kernel,
        out_shape=jax.ShapeDtypeStruct((M, N), jnp.bfloat16),
        grid=(M // tm, N // tn),
        in_specs=[pl.BlockSpec((tm, D), lambda i, j: (i, 0)),
                  pl.BlockSpec((1, D), lambda i, j: (0, 0)),
                  pl.BlockSpec((1, D), lambda i, j: (0, 0)),
                  pl.BlockSpec((D, tn), lambda i, j: (0, j)),
                  pl.BlockSpec((1, tn), lambda i, j: (0, j))],
        out_specs=pl.BlockSpec((tm, tn), lambda i, j: (i, j)),
        compiler_params=_cparams(("parallel", "parallel")),
    )(x2d, gamma, beta, w, bias)


def linear_bias_residual(x2d, w, bias, res2d):
    M, K = x2d.shape
    N = w.shape[1]
    tm = _pick_tile(M, 512, 8)
    tn = _pick_tile(N, 512, 128)
    tk = _pick_tile(K, 512, 128)
    return pl.pallas_call(
        _linear_res_kernel,
        out_shape=jax.ShapeDtypeStruct((M, N), jnp.float32),
        grid=(M // tm, N // tn, K // tk),
        in_specs=[pl.BlockSpec((tm, tk), lambda i, j, k: (i, k)),
                  pl.BlockSpec((tk, tn), lambda i, j, k: (k, j)),
                  pl.BlockSpec((1, tn), lambda i, j, k: (0, j)),
                  pl.BlockSpec((tm, tn), lambda i, j, k: (i, j))],
        out_specs=pl.BlockSpec((tm, tn), lambda i, j, k: (i, j)),
        compiler_params=_cparams(("parallel", "parallel", "arbitrary")),
    )(x2d, w, bias, res2d)


# ------------------------------- encoder glue --------------------------------

def encoder_forward(params, x, mask_add, num_heads):
    """x: (B, L, D) f32; mask_add: (B, Lk) additive mask (0 valid / NEG_INF pad)."""
    B, L, D = x.shape
    dh = D // num_heads
    inv_scale = 1.0 / math.sqrt(dh)

    # bf16 copies of the MXU weight operands (cast once, halves weight DMA).
    wqkv_bf = params['wqkv'].astype(jnp.bfloat16)
    wo_bf = params['wo'].astype(jnp.bfloat16)
    w1_bf = params['w1'].astype(jnp.bfloat16)
    w2_bf = params['w2'].astype(jnp.bfloat16)

    # fused pre-LN self-attention (+ residual) in one pallas_call per batch.
    x1 = fused_attention_block(x, params['ln1_g'], params['ln1_b'],
                               wqkv_bf, wo_bf, mask_add.reshape(B, 1, L),
                               num_heads, inv_scale)                    # (B,L,D)

    # pre-LN FFN (LN fused into W1 kernel; bias + residual fused into W2 kernel)
    x1_2d = x1.reshape(B * L, D)
    h = ln_linear_relu(x1_2d, params['ln2_g'], params['ln2_b'],
                       w1_bf, params['b1'])                             # (M,F) bf16
    out = linear_bias_residual(h, w2_bf, params['b2'], x1_2d)           # (M,D) f32
    return out.reshape(B, L, D)


def encoder_reference(params, x, mask_add, num_heads):
    """Pure-jnp f32 reference with identical math (for in-script validation)."""
    B, L, D = x.shape
    dh = D // num_heads

    def ln(t, g, b):
        mu = t.mean(-1, keepdims=True)
        var = ((t - mu) ** 2).mean(-1, keepdims=True)
        return (t - mu) / jnp.sqrt(var + LN_EPS) * g.reshape(1, 1, D) + b.reshape(1, 1, D)

    y = ln(x, params['ln1_g'], params['ln1_b'])
    qkv = jnp.einsum('bld,de->ble', y, params['wqkv'])
    q, k, v = jnp.split(qkv, 3, axis=-1)

    def heads(t):
        return t.reshape(B, L, num_heads, dh).transpose(0, 2, 1, 3)

    q, k, v = heads(q), heads(k), heads(v)
    s = jnp.einsum('bhqe,bhke->bhqk', q, k) / math.sqrt(dh)
    s = s + mask_add[:, None, None, :]
    p = jax.nn.softmax(s, axis=-1)
    ctx = jnp.einsum('bhqk,bhke->bhqe', p, v)
    ctx = ctx.transpose(0, 2, 1, 3).reshape(B, L, D)
    x1 = x + jnp.einsum('bld,de->ble', ctx, params['wo'])
    y2 = ln(x1, params['ln2_g'], params['ln2_b'])
    h = jnp.maximum(jnp.einsum('bld,df->blf', y2, params['w1'])
                    + params['b1'].reshape(1, 1, -1), 0.0)
    return x1 + jnp.einsum('blf,fd->bld', h, params['w2']) + params['b2'].reshape(1, 1, -1)


# ------------------------------ params init --------------------------------

def init_params(key, D, F, H):
    ks = jax.random.split(key, 6)

    def w(k, shape, s=0.02):
        return jax.random.normal(k, shape, jnp.float32) * s

    return dict(
        ln1_g=jnp.ones((1, D), jnp.float32), ln1_b=jnp.zeros((1, D), jnp.float32),
        # QKV weights packed lane-dense (D, 3D): columns [0:D]=Q, [D:2D]=K,
        # [2D:3D]=V, head h occupying columns [h*dh:(h+1)*dh] within each block
        # (same parameters as the three (D, D) nn.Linear weights, re-laid-out once).
        wqkv=w(ks[0], (D, 3 * D)),
        wo=w(ks[1], (D, D)),
        ln2_g=jnp.ones((1, D), jnp.float32), ln2_b=jnp.zeros((1, D), jnp.float32),
        w1=w(ks[2], (D, F)), b1=w(ks[3], (1, F)),
        w2=w(ks[4], (F, D)), b2=w(ks[5], (1, D)),
    )


# ---------------------------------- main ------------------------------------

if __name__ == "__main__":
    D, F, H = 32, 64, 4
    B, L = 2, 8

    key = jax.random.PRNGKey(0)
    k_param, k_x = jax.random.split(key)
    params = init_params(k_param, D, F, H)

    x = jax.random.normal(k_x, (B, L, D), jnp.float32)
    # additive key-padding mask: 0 for valid keys, NEG_INF for padded keys
    valid_lens = jnp.array([L, L - 2], jnp.int32)
    mask_add = (jnp.arange(L)[None, :] >= valid_lens[:, None]).astype(jnp.float32) * NEG_INF

    out = encoder_forward(params, x, mask_add, H)
    out = jax.block_until_ready(out)

    ref = encoder_reference(params, x, mask_add, H)
    ref = jax.block_until_ready(ref)

    assert out.shape == (B, L, D)
    assert bool(jnp.all(jnp.isfinite(out)))
    assert bool(jnp.allclose(out, ref, rtol=1e-2, atol=1e-2)), \
        float(jnp.max(jnp.abs(out - ref)))
    print("KERNEL_OK")
</pallas_src>

<mosaic_0001>
module attributes {stable_mosaic.version = 11 : i64} {
  func.func @_fused_attn_kernel(%arg0: i32, %arg1: memref<1x8x32xf32, #tpu.memory_space<vmem>>, %arg2: memref<1x32xf32, #tpu.memory_space<vmem>>, %arg3: memref<1x32xf32, #tpu.memory_space<vmem>>, %arg4: memref<32x96xbf16, #tpu.memory_space<vmem>>, %arg5: memref<32x32xbf16, #tpu.memory_space<vmem>>, %arg6: memref<1x1x8xf32, #tpu.memory_space<vmem>>, %arg7: memref<1x8x32xf32, #tpu.memory_space<vmem>>) attributes {dimension_semantics = [#tpu.dimension_semantics<parallel>], iteration_bounds = array<i64: 2>, scalar_prefetch = 0 : i64, scratch_operands = 0 : i64, tpu.core_type = #tpu.core_type<tc>, window_params = [{transform_indices = @transform_0, window_bounds = array<i64: 1, 8, 32>}, {pipeline_mode = #tpu.pipeline_mode<synchronous>, transform_indices = @transform_1, window_bounds = array<i64: 1, 32>}, {pipeline_mode = #tpu.pipeline_mode<synchronous>, transform_indices = @transform_2, window_bounds = array<i64: 1, 32>}, {pipeline_mode = #tpu.pipeline_mode<synchronous>, transform_indices = @transform_3, window_bounds = array<i64: 32, 96>}, {pipeline_mode = #tpu.pipeline_mode<synchronous>, transform_indices = @transform_4, window_bounds = array<i64: 32, 32>}, {transform_indices = @transform_5, window_bounds = array<i64: 1, 1, 8>}, {transform_indices = @transform_6, window_bounds = array<i64: 1, 8, 32>}]} {
    %c0 = arith.constant 0 : index
    %c0_0 = arith.constant 0 : index
    %c0_1 = arith.constant 0 : index
    %0 = vector.load %arg1[%c0, %c0_0, %c0_1] : memref<1x8x32xf32, #tpu.memory_space<vmem>>, vector<1x8x32xf32>
    %1 = vector.shape_cast %0 : vector<1x8x32xf32> to vector<8x32xf32>
    %cst = arith.constant dense<0.000000e+00> : vector<8xf32>
    %2 = vector.multi_reduction <add>, %1, %cst [1] : vector<8x32xf32> to vector<8xf32>
    %3 = vector.shape_cast %2 : vector<8xf32> to vector<8x1xf32>
    %cst_2 = arith.constant 3.200000e+01 : f32
    %4 = vector.broadcast %cst_2 : f32 to vector<8x1xf32>
    %5 = arith.divf %3, %4 : vector<8x1xf32>
    %6 = vector.broadcast %5 : vector<8x1xf32> to vector<8x32xf32>
    %7 = arith.subf %1, %6 : vector<8x32xf32>
    %8 = arith.mulf %7, %7 : vector<8x32xf32>
    %cst_3 = arith.constant dense<0.000000e+00> : vector<8xf32>
    %9 = vector.multi_reduction <add>, %8, %cst_3 [1] : vector<8x32xf32> to vector<8xf32>
    %10 = vector.shape_cast %9 : vector<8xf32> to vector<8x1xf32>
    %cst_4 = arith.constant 3.200000e+01 : f32
    %11 = vector.broadcast %cst_4 : f32 to vector<8x1xf32>
    %12 = arith.divf %10, %11 : vector<8x1xf32>
    %13 = vector.broadcast %5 : vector<8x1xf32> to vector<8x32xf32>
    %14 = arith.subf %1, %13 : vector<8x32xf32>
    %cst_5 = arith.constant 9.99999974E-6 : f32
    %15 = vector.broadcast %cst_5 : f32 to vector<8x1xf32>
    %16 = arith.addf %12, %15 : vector<8x1xf32>
    %17 = math.rsqrt %16 : vector<8x1xf32>
    %18 = vector.broadcast %17 : vector<8x1xf32> to vector<8x32xf32>
    %19 = arith.mulf %14, %18 : vector<8x32xf32>
    %c0_6 = arith.constant 0 : index
    %c0_7 = arith.constant 0 : index
    %20 = vector.load %arg2[%c0_6, %c0_7] : memref<1x32xf32, #tpu.memory_space<vmem>>, vector<1x32xf32>
    %21 = vector.broadcast %20 : vector<1x32xf32> to vector<8x32xf32>
    %22 = arith.mulf %19, %21 : vector<8x32xf32>
    %c0_8 = arith.constant 0 : index
    %c0_9 = arith.constant 0 : index
    %23 = vector.load %arg3[%c0_8, %c0_9] : memref<1x32xf32, #tpu.memory_space<vmem>>, vector<1x32xf32>
    %24 = vector.broadcast %23 : vector<1x32xf32> to vector<8x32xf32>
    %25 = arith.addf %22, %24 : vector<8x32xf32>
    %26 = arith.truncf %25 : vector<8x32xf32> to vector<8x32xbf16>
    %c0_10 = arith.constant 0 : index
    %c0_11 = arith.constant 0 : index
    %27 = vector.load %arg4[%c0_10, %c0_11] : memref<32x96xbf16, #tpu.memory_space<vmem>>, vector<32x96xbf16>
    %cst_12 = arith.constant dense<0.000000e+00> : vector<8x96xf32>
    %28 = tpu.matmul %26, %27, %cst_12 {dimension_numbers = #tpu.dot_dimension_numbers<[1], [0], [0], [1], [0, 0, 1, 1], [], []>} : vector<8x32xbf16>, vector<32x96xbf16>, vector<8x96xf32> -> vector<8x96xf32>
    %c0_13 = arith.constant 0 : index
    %c0_14 = arith.constant 0 : index
    %c0_15 = arith.constant 0 : index
    %29 = vector.load %arg6[%c0_13, %c0_14, %c0_15] : memref<1x1x8xf32, #tpu.memory_space<vmem>>, vector<1x1x8xf32>
    %30 = vector.shape_cast %29 : vector<1x1x8xf32> to vector<1x8xf32>
    %31 = vector.extract_strided_slice %28 {offsets = [0, 0], sizes = [8, 8], strides = [1, 1]} : vector<8x96xf32> to vector<8x8xf32>
    %32 = arith.truncf %31 : vector<8x8xf32> to vector<8x8xbf16>
    %33 = vector.extract_strided_slice %28 {offsets = [0, 32], sizes = [8, 8], strides = [1, 1]} : vector<8x96xf32> to vector<8x8xf32>
    %34 = arith.truncf %33 : vector<8x8xf32> to vector<8x8xbf16>
    %35 = vector.extract_strided_slice %28 {offsets = [0, 64], sizes = [8, 8], strides = [1, 1]} : vector<8x96xf32> to vector<8x8xf32>
    %36 = arith.truncf %35 : vector<8x8xf32> to vector<8x8xbf16>
    %cst_16 = arith.constant dense<0.000000e+00> : vector<8x8xf32>
    %37 = tpu.matmul %32, %34, %cst_16 {dimension_numbers = #tpu.dot_dimension_numbers<[1], [1], [0], [0], [0, 0, 1, 0], [], []>} : vector<8x8xbf16>, vector<8x8xbf16>, vector<8x8xf32> -> vector<8x8xf32>
    %cst_17 = arith.constant 0.353553385 : f32
    %38 = vector.broadcast %cst_17 : f32 to vector<8x8xf32>
    %39 = arith.mulf %37, %38 : vector<8x8xf32>
    %40 = vector.broadcast %30 : vector<1x8xf32> to vector<8x8xf32>
    %41 = arith.addf %39, %40 : vector<8x8xf32>
    %cst_18 = arith.constant dense<0xFF800000> : vector<8xf32>
    %42 = vector.multi_reduction <maximumf>, %41, %cst_18 [1] : vector<8x8xf32> to vector<8xf32>
    %43 = vector.shape_cast %42 : vector<8xf32> to vector<8x1xf32>
    %44 = vector.broadcast %43 : vector<8x1xf32> to vector<8x8xf32>
    %45 = arith.subf %41, %44 : vector<8x8xf32>
    %46 = math.exp %45 : vector<8x8xf32>
    %cst_19 = arith.constant dense<0.000000e+00> : vector<8xf32>
    %47 = vector.multi_reduction <add>, %46, %cst_19 [1] : vector<8x8xf32> to vector<8xf32>
    %48 = vector.shape_cast %47 : vector<8xf32> to vector<8x1xf32>
    %49 = tpu.reciprocal %48 {approx = true} : vector<8x1xf32> -> vector<8x1xf32>
    %50 = vector.broadcast %49 : vector<8x1xf32> to vector<8x8xf32>
    %51 = arith.mulf %46, %50 : vector<8x8xf32>
    %52 = arith.truncf %51 : vector<8x8xf32> to vector<8x8xbf16>
    %cst_20 = arith.constant dense<0.000000e+00> : vector<8x8xf32>
    %53 = tpu.matmul %52, %36, %cst_20 {dimension_numbers = #tpu.dot_dimension_numbers<[1], [0], [0], [1], [0, 0, 1, 1], [], []>} : vector<8x8xbf16>, vector<8x8xbf16>, vector<8x8xf32> -> vector<8x8xf32>
    %54 = vector.extract_strided_slice %28 {offsets = [0, 8], sizes = [8, 8], strides = [1, 1]} : vector<8x96xf32> to vector<8x8xf32>
    %55 = arith.truncf %54 : vector<8x8xf32> to vector<8x8xbf16>
    %56 = vector.extract_strided_slice %28 {offsets = [0, 40], sizes = [8, 8], strides = [1, 1]} : vector<8x96xf32> to vector<8x8xf32>
    %57 = arith.truncf %56 : vector<8x8xf32> to vector<8x8xbf16>
    %58 = vector.extract_strided_slice %28 {offsets = [0, 72], sizes = [8, 8], strides = [1, 1]} : vector<8x96xf32> to vector<8x8xf32>
    %59 = arith.truncf %58 : vector<8x8xf32> to vector<8x8xbf16>
    %cst_21 = arith.constant dense<0.000000e+00> : vector<8x8xf32>
    %60 = tpu.matmul %55, %57, %cst_21 {dimension_numbers = #tpu.dot_dimension_numbers<[1], [1], [0], [0], [0, 0, 1, 0], [], []>} : vector<8x8xbf16>, vector<8x8xbf16>, vector<8x8xf32> -> vector<8x8xf32>
    %cst_22 = arith.constant 0.353553385 : f32
    %61 = vector.broadcast %cst_22 : f32 to vector<8x8xf32>
    %62 = arith.mulf %60, %61 : vector<8x8xf32>
    %63 = vector.broadcast %30 : vector<1x8xf32> to vector<8x8xf32>
    %64 = arith.addf %62, %63 : vector<8x8xf32>
    %cst_23 = arith.constant dense<0xFF800000> : vector<8xf32>
    %65 = vector.multi_reduction <maximumf>, %64, %cst_23 [1] : vector<8x8xf32> to vector<8xf32>
    %66 = vector.shape_cast %65 : vector<8xf32> to vector<8x1xf32>
    %67 = vector.broadcast %66 : vector<8x1xf32> to vector<8x8xf32>
    %68 = arith.subf %64, %67 : vector<8x8xf32>
    %69 = math.exp %68 : vector<8x8xf32>
    %cst_24 = arith.constant dense<0.000000e+00> : vector<8xf32>
    %70 = vector.multi_reduction <add>, %69, %cst_24 [1] : vector<8x8xf32> to vector<8xf32>
    %71 = vector.shape_cast %70 : vector<8xf32> to vector<8x1xf32>
    %72 = tpu.reciprocal %71 {approx = true} : vector<8x1xf32> -> vector<8x1xf32>
    %73 = vector.broadcast %72 : vector<8x1xf32> to vector<8x8xf32>
    %74 = arith.mulf %69, %73 : vector<8x8xf32>
    %75 = arith.truncf %74 : vector<8x8xf32> to vector<8x8xbf16>
    %cst_25 = arith.constant dense<0.000000e+00> : vector<8x8xf32>
    %76 = tpu.matmul %75, %59, %cst_25 {dimension_numbers = #tpu.dot_dimension_numbers<[1], [0], [0], [1], [0, 0, 1, 1], [], []>} : vector<8x8xbf16>, vector<8x8xbf16>, vector<8x8xf32> -> vector<8x8xf32>
    %77 = vector.extract_strided_slice %28 {offsets = [0, 16], sizes = [8, 8], strides = [1, 1]} : vector<8x96xf32> to vector<8x8xf32>
    %78 = arith.truncf %77 : vector<8x8xf32> to vector<8x8xbf16>
    %79 = vector.extract_strided_slice %28 {offsets = [0, 48], sizes = [8, 8], strides = [1, 1]} : vector<8x96xf32> to vector<8x8xf32>
    %80 = arith.truncf %79 : vector<8x8xf32> to vector<8x8xbf16>
    %81 = vector.extract_strided_slice %28 {offsets = [0, 80], sizes = [8, 8], strides = [1, 1]} : vector<8x96xf32> to vector<8x8xf32>
    %82 = arith.truncf %81 : vector<8x8xf32> to vector<8x8xbf16>
    %cst_26 = arith.constant dense<0.000000e+00> : vector<8x8xf32>
    %83 = tpu.matmul %78, %80, %cst_26 {dimension_numbers = #tpu.dot_dimension_numbers<[1], [1], [0], [0], [0, 0, 1, 0], [], []>} : vector<8x8xbf16>, vector<8x8xbf16>, vector<8x8xf32> -> vector<8x8xf32>
    %cst_27 = arith.constant 0.353553385 : f32
    %84 = vector.broadcast %cst_27 : f32 to vector<8x8xf32>
    %85 = arith.mulf %83, %84 : vector<8x8xf32>
    %86 = vector.broadcast %30 : vector<1x8xf32> to vector<8x8xf32>
    %87 = arith.addf %85, %86 : vector<8x8xf32>
    %cst_28 = arith.constant dense<0xFF800000> : vector<8xf32>
    %88 = vector.multi_reduction <maximumf>, %87, %cst_28 [1] : vector<8x8xf32> to vector<8xf32>
    %89 = vector.shape_cast %88 : vector<8xf32> to vector<8x1xf32>
    %90 = vector.broadcast %89 : vector<8x1xf32> to vector<8x8xf32>
    %91 = arith.subf %87, %90 : vector<8x8xf32>
    %92 = math.exp %91 : vector<8x8xf32>
    %cst_29 = arith.constant dense<0.000000e+00> : vector<8xf32>
    %93 = vector.multi_reduction <add>, %92, %cst_29 [1] : vector<8x8xf32> to vector<8xf32>
    %94 = vector.shape_cast %93 : vector<8xf32> to vector<8x1xf32>
    %95 = tpu.reciprocal %94 {approx = true} : vector<8x1xf32> -> vector<8x1xf32>
    %96 = vector.broadcast %95 : vector<8x1xf32> to vector<8x8xf32>
    %97 = arith.mulf %92, %96 : vector<8x8xf32>
    %98 = arith.truncf %97 : vector<8x8xf32> to vector<8x8xbf16>
    %cst_30 = arith.constant dense<0.000000e+00> : vector<8x8xf32>
    %99 = tpu.matmul %98, %82, %cst_30 {dimension_numbers = #tpu.dot_dimension_numbers<[1], [0], [0], [1], [0, 0, 1, 1], [], []>} : vector<8x8xbf16>, vector<8x8xbf16>, vector<8x8xf32> -> vector<8x8xf32>
    %100 = vector.extract_strided_slice %28 {offsets = [0, 24], sizes = [8, 8], strides = [1, 1]} : vector<8x96xf32> to vector<8x8xf32>
    %101 = arith.truncf %100 : vector<8x8xf32> to vector<8x8xbf16>
    %102 = vector.extract_strided_slice %28 {offsets = [0, 56], sizes = [8, 8], strides = [1, 1]} : vector<8x96xf32> to vector<8x8xf32>
    %103 = arith.truncf %102 : vector<8x8xf32> to vector<8x8xbf16>
    %104 = vector.extract_strided_slice %28 {offsets = [0, 88], sizes = [8, 8], strides = [1, 1]} : vector<8x96xf32> to vector<8x8xf32>
    %105 = arith.truncf %104 : vector<8x8xf32> to vector<8x8xbf16>
    %cst_31 = arith.constant dense<0.000000e+00> : vector<8x8xf32>
    %106 = tpu.matmul %101, %103, %cst_31 {dimension_numbers = #tpu.dot_dimension_numbers<[1], [1], [0], [0], [0, 0, 1, 0], [], []>} : vector<8x8xbf16>, vector<8x8xbf16>, vector<8x8xf32> -> vector<8x8xf32>
    %cst_32 = arith.constant 0.353553385 : f32
    %107 = vector.broadcast %cst_32 : f32 to vector<8x8xf32>
    %108 = arith.mulf %106, %107 : vector<8x8xf32>
    %109 = vector.broadcast %30 : vector<1x8xf32> to vector<8x8xf32>
    %110 = arith.addf %108, %109 : vector<8x8xf32>
    %cst_33 = arith.constant dense<0xFF800000> : vector<8xf32>
    %111 = vector.multi_reduction <maximumf>, %110, %cst_33 [1] : vector<8x8xf32> to vector<8xf32>
    %112 = vector.shape_cast %111 : vector<8xf32> to vector<8x1xf32>
    %113 = vector.broadcast %112 : vector<8x1xf32> to vector<8x8xf32>
    %114 = arith.subf %110, %113 : vector<8x8xf32>
    %115 = math.exp %114 : vector<8x8xf32>
    %cst_34 = arith.constant dense<0.000000e+00> : vector<8xf32>
    %116 = vector.multi_reduction <add>, %115, %cst_34 [1] : vector<8x8xf32> to vector<8xf32>
    %117 = vector.shape_cast %116 : vector<8xf32> to vector<8x1xf32>
    %118 = tpu.reciprocal %117 {approx = true} : vector<8x1xf32> -> vector<8x1xf32>
    %119 = vector.broadcast %118 : vector<8x1xf32> to vector<8x8xf32>
    %120 = arith.mulf %115, %119 : vector<8x8xf32>
    %121 = arith.truncf %120 : vector<8x8xf32> to vector<8x8xbf16>
    %cst_35 = arith.constant dense<0.000000e+00> : vector<8x8xf32>
    %122 = tpu.matmul %121, %105, %cst_35 {dimension_numbers = #tpu.dot_dimension_numbers<[1], [0], [0], [1], [0, 0, 1, 1], [], []>} : vector<8x8xbf16>, vector<8x8xbf16>, vector<8x8xf32> -> vector<8x8xf32>
    %123 = tpu.concatenate %53, %76, %99, %122 in 1 : vector<8x8xf32>, vector<8x8xf32>, vector<8x8xf32>, vector<8x8xf32> -> vector<8x32xf32>
    %124 = arith.truncf %123 : vector<8x32xf32> to vector<8x32xbf16>
    %c0_36 = arith.constant 0 : index
    %c0_37 = arith.constant 0 : index
    %125 = vector.load %arg5[%c0_36, %c0_37] : memref<32x32xbf16, #tpu.memory_space<vmem>>, vector<32x32xbf16>
    %cst_38 = arith.constant dense<0.000000e+00> : vector<8x32xf32>
    %126 = tpu.matmul %124, %125, %cst_38 {dimension_numbers = #tpu.dot_dimension_numbers<[1], [0], [0], [1], [0, 0, 1, 1], [], []>} : vector<8x32xbf16>, vector<32x32xbf16>, vector<8x32xf32> -> vector<8x32xf32>
    %127 = arith.addf %1, %126 : vector<8x32xf32>
    %c0_39 = arith.constant 0 : index
    %c0_40 = arith.constant 0 : index
    %c0_41 = arith.constant 0 : index
    %128 = vector.load %arg7[%c0_39, %c0_40, %c0_41] : memref<1x8x32xf32, #tpu.memory_space<vmem>>, vector<1x8x32xf32>
    %129 = vector.shape_cast %128 : vector<1x8x32xf32> to vector<8x32xf32>
    %130 = vector.shape_cast %127 : vector<8x32xf32> to vector<1x8x32xf32>
    tpu.vector_store %arg7[%c0_39, %c0_40, %c0_41], %130 {strides = array<i32>} : memref<1x8x32xf32, #tpu.memory_space<vmem>>, vector<1x8x32xf32>,
    return
  }
  func.func @transform_0(%arg0: i32) -> (i32, i32, i32) {
    %c0_i32 = arith.constant 0 : i32
    %c0_i32_0 = arith.constant 0 : i32
    %c0_i32_1 = arith.constant 0 : i32
    return %arg0, %c0_i32, %c0_i32_0 : i32, i32, i32
  }
  func.func @transform_1(%arg0: i32) -> (i32, i32) {
    %c0_i32 = arith.constant 0 : i32
    %c0_i32_0 = arith.constant 0 : i32
    %c0_i32_1 = arith.constant 0 : i32
    return %c0_i32, %c0_i32_0 : i32, i32
  }
  func.func @transform_2(%arg0: i32) -> (i32, i32) {
    %c0_i32 = arith.constant 0 : i32
    %c0_i32_0 = arith.constant 0 : i32
    %c0_i32_1 = arith.constant 0 : i32
    return %c0_i32, %c0_i32_0 : i32, i32
  }
  func.func @transform_3(%arg0: i32) -> (i32, i32) {
    %c0_i32 = arith.constant 0 : i32
    %c0_i32_0 = arith.constant 0 : i32
    %c0_i32_1 = arith.constant 0 : i32
    return %c0_i32, %c0_i32_0 : i32, i32
  }
  func.func @transform_4(%arg0: i32) -> (i32, i32) {
    %c0_i32 = arith.constant 0 : i32
    %c0_i32_0 = arith.constant 0 : i32
    %c0_i32_1 = arith.constant 0 : i32
    return %c0_i32, %c0_i32_0 : i32, i32
  }
  func.func @transform_5(%arg0: i32) -> (i32, i32, i32) {
    %c0_i32 = arith.constant 0 : i32
    %c0_i32_0 = arith.constant 0 : i32
    %c0_i32_1 = arith.constant 0 : i32
    return %arg0, %c0_i32, %c0_i32_0 : i32, i32, i32
  }
  func.func @transform_6(%arg0: i32) -> (i32, i32, i32) {
    %c0_i32 = arith.constant 0 : i32
    %c0_i32_0 = arith.constant 0 : i32
    %c0_i32_1 = arith.constant 0 : i32
    return %arg0, %c0_i32, %c0_i32_0 : i32, i32, i32
  }
}

</mosaic_0001>

<llo_original>
// kernel: tpu_custom_call.1
$region0: #{tpu_custom_call.1}
  #allocation0 [shape = 'u32[]', space=smem, size = 0x4, offset = 0x4, fixed_abs, tag = 'smem constant byte address 0x4 - core index']
  #allocation1 [shape = 'u32[144,128]{1,0:T(1,128)}', space=vmem, size = 0x12000, scoped, tag = 'internal scratch']
  %s0 = inlined_call_operand.hbm [shape: f32[2,8,32], index: 0, kind: input, shape index: {}]
  %s1 = inlined_call_operand.vmem [shape: f32[1,32], index: 1, kind: input, shape index: {}]
  %s2 = inlined_call_operand.vmem [shape: f32[1,32], index: 2, kind: input, shape index: {}]
  %s3 = inlined_call_operand.hbm [shape: bf16[32,96], index: 3, kind: input, shape index: {}]
  %s4 = inlined_call_operand.hbm [shape: bf16[32,32], index: 4, kind: input, shape index: {}]
  %s5 = inlined_call_operand.vmem [shape: f32[2,1,8], index: 5, kind: input, shape index: {}]
  %s6 = inlined_call_operand.hbm [shape: f32[2,8,32], index: 6, kind: output, shape index: {}]
  %s7 = sld [smem:[#allocation0]]
  $region69: #{tpu_custom_call.1} parent=0
    _
  %s9 = ssub.s32 1, %s7
  %s10 = scalar_select 0, %s9, %s7
  $region1: #{tpu_custom_call.1} parent=0
    #allocation2 [shape = 'u8[8192]{0}', space=vmem, size = 0x2000, scoped, tag = 'input window, operand 0']
    #allocation3 [shape = 's32[2]{0}', space=sflag, size = 0x8, scoped, tag = 'scoped memory for tpu_custom_call.1']
    #allocation4 [shape = 's32[2]{0}', space=sflag, size = 0x8, scoped, tag = 'scoped memory for tpu_custom_call.1']
    #allocation5 [shape = 'u8[8192]{0}', space=vmem, size = 0x2000, scoped, tag = 'input window, operand 3, single buffered']
    #allocation6 [shape = 's32[1]{0}', space=sflag, size = 0x4, scoped, tag = 'scoped memory for tpu_custom_call.1']
    #allocation7 [shape = 'u8[8192]{0}', space=vmem, size = 0x2000, scoped, tag = 'input window, operand 4, single buffered']
    #allocation8 [shape = 'u8[8192]{0}', space=vmem, size = 0x2000, scoped, tag = 'output window, operand 0']
    %11 = vsyncpa [#allocation3], 0
    %s12 = scalar_lea.sflag [#allocation3], 1
    %13 = vsyncpa %s12, 0
    %14 = vsyncpa [#allocation6], 0
    %15 = vsyncpa [#allocation4], 0
    %s16 = scalar_lea.sflag [#allocation4], 1
    %17 = vsyncpa %s16, 0
    loop: start=0, step=1, limit=4
    $region2: #{tpu_custom_call.1} parent=1 // loop_pre_header
      _
    $region3: #{tpu_custom_call.1} parent=1 // loop_header
      %s19 = sphi 0, %s23
      %p20 = scmp.ge.s32.totalorder %s19, 4
      %s29 = sphi 0, %s31
      %s32 = sphi 0, %s29
      %s33 = sphi 0, %s32
      %s49 = sphi 0, %s33
      %s53 = sphi 0, %s53
      %s55 = sphi 0, %s53
      %s56 = sphi 0, %s55
      %s70 = sphi 0, %s56
      %s74 = sphi 0, %s74
      %s76 = sphi 0, %s74
      %s77 = sphi 0, %s76
      %s91 = sphi 0, %s77
      %s95 = sphi 0, %s95
      %s97 = sphi 0, %s95
      %s98 = sphi 0, %s97
      %s112 = sphi 0, %s98
      %s116 = sphi 0, %s116
      %s118 = sphi 0, %s116
      %s119 = sphi 0, %s118
      %s133 = sphi 0, %s119
      %s139 = sphi 0, %s141
      %s142 = sphi 0, %s139
      %s143 = sphi 0, %s142
      %s159 = sphi 0, %s143
      %s165 = sphi 0, %s167
      %s168 = sphi 0, %s165
      %s169 = sphi 0, %s168
      %s185 = sphi 0, %s169
    $region4: #{tpu_custom_call.1} parent=1 // loop_header_branch
      %22 = sbr.rel (%p20) target = $region8
    $region5: #{tpu_custom_call.1} parent=1 // loop_body
      %s24 = ssub.s32 %s19, 1
      %s25 = ssub.s32 %s19, 2
      %s26 = sadd.s32 %s19, 1
      %s27 = ssub.s32 %s19, %s26
      %p28 = scmp.eq.s32.totalorder %s27, 0
      %s30 = sadd.s32 %s29, 1
      %s31 = scalar_select %p28, %s29, %s30
      %p34 = pneg %p28
      %p35 = scmp.eq.s32.totalorder %s19, 1
      %p36 = por %p34, %p35
      %p37 = scmp.ne.s32.totalorder %s29, %s32
      %p38 = scmp.eq.s32.totalorder %s19, 0
      %p39 = por %p37, %p38
      %p40 = scmp.ne.s32.totalorder %s29, %s32
      %p41 = scmp.eq.s32.totalorder %s24, 1
      %p42 = por %p40, %p41
      %p43 = scmp.ne.s32.totalorder %s32, %s33
      %p44 = scmp.eq.s32.totalorder %s24, 0
      %p45 = por %p43, %p44
      %p46 = scmp.ne.s32.totalorder %s32, %s33
      %p47 = scmp.eq.s32.totalorder %s25, 1
      %p48 = por %p46, %p47
      %p50 = scmp.ne.s32.totalorder %s33, %s49
      %p51 = scmp.eq.s32.totalorder %s25, 0
      %p52 = por %p50, %p51
      %s54 = sadd.s32 %s53, 1
      %p57 = scmp.eq.s32.totalorder %s19, 1
      %p58 = scmp.ne.s32.totalorder %s53, %s55
      %p59 = scmp.eq.s32.totalorder %s19, 0
      %p60 = por %p58, %p59
      %p61 = scmp.ne.s32.totalorder %s53, %s55
      %p62 = scmp.eq.s32.totalorder %s24, 1
      %p63 = por %p61, %p62
      %p64 = scmp.ne.s32.totalorder %s55, %s56
      %p65 = scmp.eq.s32.totalorder %s24, 0
      %p66 = por %p64, %p65
      %p67 = scmp.ne.s32.totalorder %s55, %s56
      %p68 = scmp.eq.s32.totalorder %s25, 1
      %p69 = por %p67, %p68
      %p71 = scmp.ne.s32.totalorder %s56, %s70
      %p72 = scmp.eq.s32.totalorder %s25, 0
      %p73 = por %p71, %p72
      %s75 = sadd.s32 %s74, 1
      %p78 = scmp.eq.s32.totalorder %s19, 1
      %p79 = scmp.ne.s32.totalorder %s74, %s76
      %p80 = scmp.eq.s32.totalorder %s19, 0
      %p81 = por %p79, %p80
      %p82 = scmp.ne.s32.totalorder %s74, %s76
      %p83 = scmp.eq.s32.totalorder %s24, 1
      %p84 = por %p82, %p83
      %p85 = scmp.ne.s32.totalorder %s76, %s77
      %p86 = scmp.eq.s32.totalorder %s24, 0
      %p87 = por %p85, %p86
      %p88 = scmp.ne.s32.totalorder %s76, %s77
      %p89 = scmp.eq.s32.totalorder %s25, 1
      %p90 = por %p88, %p89
      %p92 = scmp.ne.s32.totalorder %s77, %s91
      %p93 = scmp.eq.s32.totalorder %s25, 0
      %p94 = por %p92, %p93
      %s96 = sadd.s32 %s95, 1
      %p99 = scmp.eq.s32.totalorder %s19, 1
      %p100 = scmp.ne.s32.totalorder %s95, %s97
      %p101 = scmp.eq.s32.totalorder %s19, 0
      %p102 = por %p100, %p101
      %p103 = scmp.ne.s32.totalorder %s95, %s97
      %p104 = scmp.eq.s32.totalorder %s24, 1
      %p105 = por %p103, %p104
      %p106 = scmp.ne.s32.totalorder %s97, %s98
      %p107 = scmp.eq.s32.totalorder %s24, 0
      %p108 = por %p106, %p107
      %p109 = scmp.ne.s32.totalorder %s97, %s98
      %p110 = scmp.eq.s32.totalorder %s25, 1
      %p111 = por %p109, %p110
      %p113 = scmp.ne.s32.totalorder %s98, %s112
      %p114 = scmp.eq.s32.totalorder %s25, 0
      %p115 = por %p113, %p114
      %s117 = sadd.s32 %s116, 1
      %p120 = scmp.eq.s32.totalorder %s19, 1
      %p121 = scmp.ne.s32.totalorder %s116, %s118
      %p122 = scmp.eq.s32.totalorder %s19, 0
      %p123 = por %p121, %p122
      %p124 = scmp.ne.s32.totalorder %s116, %s118
      %p125 = scmp.eq.s32.totalorder %s24, 1
      %p126 = por %p124, %p125
      %p127 = scmp.ne.s32.totalorder %s118, %s119
      %p128 = scmp.eq.s32.totalorder %s24, 0
      %p129 = por %p127, %p128
      %p130 = scmp.ne.s32.totalorder %s118, %s119
      %p131 = scmp.eq.s32.totalorder %s25, 1
      %p132 = por %p130, %p131
      %p134 = scmp.ne.s32.totalorder %s119, %s133
      %p135 = scmp.eq.s32.totalorder %s25, 0
      %p136 = por %p134, %p135
      %s137 = ssub.s32 %s19, %s26
      %p138 = scmp.eq.s32.totalorder %s137, 0
      %s140 = sadd.s32 %s139, 1
      %s141 = scalar_select %p138, %s139, %s140
      %p144 = pneg %p138
      %p145 = scmp.eq.s32.totalorder %s19, 1
      %p146 = por %p144, %p145
      %p147 = scmp.ne.s32.totalorder %s139, %s142
      %p148 = scmp.eq.s32.totalorder %s19, 0
      %p149 = por %p147, %p148
      %p150 = scmp.ne.s32.totalorder %s139, %s142
      %p151 = scmp.eq.s32.totalorder %s24, 1
      %p152 = por %p150, %p151
      %p153 = scmp.ne.s32.totalorder %s142, %s143
      %p154 = scmp.eq.s32.totalorder %s24, 0
      %p155 = por %p153, %p154
      %p156 = scmp.ne.s32.totalorder %s142, %s143
      %p157 = scmp.eq.s32.totalorder %s25, 1
      %p158 = por %p156, %p157
      %p160 = scmp.ne.s32.totalorder %s143, %s159
      %p161 = scmp.eq.s32.totalorder %s25, 0
      %p162 = por %p160, %p161
      %s163 = ssub.s32 %s19, %s26
      %p164 = scmp.eq.s32.totalorder %s163, 0
      %s166 = sadd.s32 %s165, 1
      %s167 = scalar_select %p164, %s165, %s166
      %p170 = pneg %p164
      %p171 = scmp.eq.s32.totalorder %s19, 1
      %p172 = por %p170, %p171
      %p173 = scmp.ne.s32.totalorder %s165, %s168
      %p174 = scmp.eq.s32.totalorder %s19, 0
      %p175 = por %p173, %p174
      %p176 = scmp.ne.s32.totalorder %s165, %s168
      %p177 = scmp.eq.s32.totalorder %s24, 1
      %p178 = por %p176, %p177
      %p179 = scmp.ne.s32.totalorder %s168, %s169
      %p180 = scmp.eq.s32.totalorder %s24, 0
      %p181 = por %p179, %p180
      %p182 = scmp.ne.s32.totalorder %s168, %s169
      %p183 = scmp.eq.s32.totalorder %s25, 1
      %p184 = por %p182, %p183
      %p186 = scmp.ne.s32.totalorder %s169, %s185
      %p187 = scmp.eq.s32.totalorder %s25, 0
      %p188 = por %p186, %p187
      %p189 = scmp.le.s32.totalorder 1, %s19
      %p190 = scmp.lt.s32.totalorder %s19, 3
      %p191 = pnand %p189, %p190
      %p192 = pneg %p191
      // Predicated region
      $region9: #{tpu_custom_call.1} parent=5 // pred_check
        _
      $region10: #{tpu_custom_call.1} parent=5 // pred_check_branch
        %194 = sbr.rel (%p191) target = $region12
      $region11: #{tpu_custom_call.1} parent=5 // pred_region
        %s195 = ssub.s32 %s19, 1
        // Predicated region
        $region13: #{tpu_custom_call.1} parent=11 // pred_check
          %p196 = pneg %p66
        $region14: #{tpu_custom_call.1} parent=11 // pred_check_branch
          %198 = sbr.rel (%p196) target = $region16
        $region15: #{tpu_custom_call.1} parent=11 // pred_region
          _
        $region16: #{tpu_custom_call.1} parent=11 // pred_fallthru
          _
        // Predicated region
        $region17: #{tpu_custom_call.1} parent=11 // pred_check
          %p199 = pneg %p87
        $region18: #{tpu_custom_call.1} parent=11 // pred_check_branch
          %201 = sbr.rel (%p199) target = $region20
        $region19: #{tpu_custom_call.1} parent=11 // pred_region
          _
        $region20: #{tpu_custom_call.1} parent=11 // pred_fallthru
          _
        // Predicated region
        $region21: #{tpu_custom_call.1} parent=11 // pred_check
          %p202 = pneg %p108
        $region22: #{tpu_custom_call.1} parent=11 // pred_check_branch
          %204 = sbr.rel (%p202) target = $region24
        $region23: #{tpu_custom_call.1} parent=11 // pred_region
          %s206 = ssub.s32 256, 256
          %207 = vsyncadd [#allocation6], %s206
          %s208 = sshll.u32 [#allocation5], 4
          %s209 = int_to_ptr.vmem [resolvable:$true] %s208
          %214 = dma.hbm_to_vmem [thread:$0]  %s3, 256, %s209, [#allocation6], 64, 64, 4
        $region24: #{tpu_custom_call.1} parent=11 // pred_fallthru
          _
        // Predicated region
        $region25: #{tpu_custom_call.1} parent=11 // pred_check
          %p215 = pneg %p129
        $region26: #{tpu_custom_call.1} parent=11 // pred_check_branch
          %217 = sbr.rel (%p215) target = $region28
        $region27: #{tpu_custom_call.1} parent=11 // pred_region
          %s219 = ssub.s32 256, 256
          %220 = vsyncadd [#allocation6], %s219
          %s221 = sshll.u32 [#allocation7], 4
          %s222 = int_to_ptr.vmem [resolvable:$true] %s221
          %227 = dma.hbm_to_vmem [thread:$0]  %s4, 256, %s222, [#allocation6], 64, 64, 4
        $region28: #{tpu_custom_call.1} parent=11 // pred_fallthru
          _
      $region12: #{tpu_custom_call.1} parent=5 // pred_fallthru
        _
      %p228 = scmp.lt.s32.totalorder %s19, 2
      // Predicated region
      $region29: #{tpu_custom_call.1} parent=5 // pred_check
        %p229 = pneg %p228
      $region30: #{tpu_custom_call.1} parent=5 // pred_check_branch
        %231 = sbr.rel (%p229) target = $region32
      $region31: #{tpu_custom_call.1} parent=5 // pred_region
        // Predicated region
        $region33: #{tpu_custom_call.1} parent=31 // pred_check
          %p232 = pneg %p39
        $region34: #{tpu_custom_call.1} parent=31 // pred_check_branch
          %234 = sbr.rel (%p232) target = $region36
        $region35: #{tpu_custom_call.1} parent=31 // pred_region
          %s235 = sand.u32 %s29, 1
          %s236 = scalar_lea.sflag [#allocation3], %s235
          %s237 = sand.u32 %s29, 1
          %s238 = smul.addr %s237, 8
          %s239 = scalar_lea.vmem [#allocation2], %s238
          %s241 = ssub.s32 128, 128
          %242 = vsyncadd %s236, %s241
          %s243 = smul.addr %s19, 128
          %s244 = scalar_lea.hbm %s0, %s243
          %s246 = sshll.u32 %s239, 4
          %s247 = int_to_ptr.vmem [resolvable:$true] %s246
          %249 = dma.hbm_to_vmem [thread:$0]  %s244, 128, %s247, %s236
        $region36: #{tpu_custom_call.1} parent=31 // pred_fallthru
          _
        // Predicated region
        $region37: #{tpu_custom_call.1} parent=31 // pred_check
          %p250 = pneg %p149
        $region38: #{tpu_custom_call.1} parent=31 // pred_check_branch
          %252 = sbr.rel (%p250) target = $region40
        $region39: #{tpu_custom_call.1} parent=31 // pred_region
          %p253 = scmp.lt.s32.totalorder %s19, 1
          %s254 = scalar_select %p253, %s19, 1
          %s255 = scalar_lea.vmem %s5, %s254
        $region40: #{tpu_custom_call.1} parent=31 // pred_fallthru
          _
      $region32: #{tpu_custom_call.1} parent=5 // pred_fallthru
        _
      %p256 = scmp.le.s32.totalorder 1, %s19
      %p257 = scmp.lt.s32.totalorder %s19, 3
      %p258 = pnand %p256, %p257
      %p259 = pneg %p258
      // Predicated region
      $region41: #{tpu_custom_call.1} parent=5 // pred_check
        _
      $region42: #{tpu_custom_call.1} parent=5 // pred_check_branch
        %261 = sbr.rel (%p258) target = $region44
      $region43: #{tpu_custom_call.1} parent=5 // pred_region
        %s262 = ssub.s32 %s19, 1
        %s263 = sand.u32 %s32, 1
        %s264 = scalar_lea.sflag [#allocation3], %s263
        %s265 = sand.u32 %s32, 1
        %s266 = smul.addr %s265, 8
        %s267 = scalar_lea.vmem [#allocation2], %s266
        // Predicated region
        $region45: #{tpu_custom_call.1} parent=43 // pred_check
          %p268 = pneg %p45
        $region46: #{tpu_custom_call.1} parent=43 // pred_check_branch
          %270 = sbr.rel (%p268) target = $region48
        $region47: #{tpu_custom_call.1} parent=43 // pred_region
          %271 = dma.done %s264, 128
        $region48: #{tpu_custom_call.1} parent=43 // pred_fallthru
          _
        // Predicated region
        $region49: #{tpu_custom_call.1} parent=43 // pred_check
          %p272 = pneg %p108
        $region50: #{tpu_custom_call.1} parent=43 // pred_check_branch
          %274 = sbr.rel (%p272) target = $region52
        $region51: #{tpu_custom_call.1} parent=43 // pred_region
          %275 = dma.done [#allocation6], 256
        $region52: #{tpu_custom_call.1} parent=43 // pred_fallthru
          _
        // Predicated region
        $region53: #{tpu_custom_call.1} parent=43 // pred_check
          %p276 = pneg %p129
        $region54: #{tpu_custom_call.1} parent=43 // pred_check_branch
          %278 = sbr.rel (%p276) target = $region56
        $region55: #{tpu_custom_call.1} parent=43 // pred_region
          %279 = dma.done [#allocation6], 256
        $region56: #{tpu_custom_call.1} parent=43 // pred_fallthru
          _
        %s280 = sand.u32 %s32, 1
        %s281 = scalar_lea.sflag [#allocation3], %s280
        %s282 = sand.u32 %s32, 1
        %s283 = smul.addr %s282, 8
        %s284 = scalar_lea.vmem [#allocation2], %s283
        %p285 = pneg %p45
        %p286 = pneg %p42
        %p287 = pneg %p66
        %p288 = pneg %p63
        %p289 = pneg %p87
        %p290 = pneg %p84
        %p291 = pneg %p108
        %p292 = pneg %p105
        %p293 = pneg %p129
        %p294 = pneg %p126
        %p295 = scmp.lt.s32.totalorder %s24, 1
        %s296 = scalar_select %p295, %s24, 1
        %s297 = scalar_lea.vmem %s5, %s296
        %p298 = pneg %p155
        %p299 = pneg %p152
        %p300 = pneg %p181
        %p301 = pneg %p178
        %s302 = sand.u32 %s168, 1
        %s303 = scalar_lea.sflag [#allocation4], %s302
        %s304 = sand.u32 %s168, 1
        %s305 = smul.addr %s304, 8
        %s306 = scalar_lea.vmem [#allocation8], %s305
        %p307 = scmp.lt.s32.totalorder %s24, 1
        %s308 = scalar_select %p307, %s24, 1
        %s309 = scalar_lea.vmem %s5, %s308
        %v311 = vld [vmem:[%s267] sm:$0xff]
        %vm312 = vcmask 261120
        %v313 = vsel %vm312, %v311, 0.0
        %314 = vadd.xlane.f32.xlu0 %v313
        %v315 = vpop.xlane.xlu0 %314
        %v316 = vrcp.pop 32.0
        %v317 = vmul.f32 %v315, %v316
        %v318 = vsub.f32 %v311, %v317
        %v319 = vmul.f32 %v318, %v318
        %v320 = vsel %vm312, %v319, 0.0
        %321 = vadd.xlane.f32.xlu0 %v320
        %v322 = vpop.xlane.xlu0 %321
        %v323 = vmul.f32 %v322, %v316
        %v324 = vadd.f32 %v323, 1e-05
        %v325 = vrsqrt.pop %v324
        %v326 = vmul.f32 %v318, %v325
        %v327 = vld [vmem:[%s1] sm:$0x1]
        %v329 = vlaneseq
        %v330 = vshrl.u32 %v329, 7
        %v331 = vsub.s32 0, %v330
        %v332 = vrot.slane %v327, %v331
        %v334 = vmul.f32 %v326, %v332
        %v335 = vld [vmem:[%s2] sm:$0x1]
        %v337 = vlaneseq
        %v338 = vshrl.u32 %v337, 7
        %v339 = vsub.s32 0, %v338
        %v340 = vrot.slane %v335, %v339
        %v342 = vadd.f32 %v334, %v340
        %v343 = vpack.c.bf16 %v342, %v342
        %v344 = vld [vmem:[#allocation5] sm:$0xf]
        %v345 = vld [vmem:[#allocation5 + $0x4] sm:$0xf]
        %v346 = vld [vmem:[#allocation5 + $0x8] sm:$0xf]
        %v347 = vld [vmem:[#allocation5 + $0xc] sm:$0xf]
        %v352 = vunpack.c.l.b16 %v344
        %v353 = vunpack.c.l.b16 %v345
        %v354 = vunpack.c.l.b16 %v346
        %v355 = vunpack.c.l.b16 %v347
        %v356 = vpack.c.b16 %v353, %v352
        %v357 = vpack.c.b16 %v355, %v354
        %v361 = vsel %vm312, %v343, 0
        %363 = vmatprep.subr.bf16.mxu0 0
        %364 = vmatpush1.bf16.msra.mxu0 %v356
        %365 = vmatprep.subr.bf16.mxu0 0
        %366 = vmatpush1.bf16.msra.mxu0 %v357
        %367 = vmatprep.subr.bf16.mxu0 0
        %368 = vmatpush1.bf16.msra.mxu0 0
        %369 = vmatprep.subr.bf16.mxu0 0
        %370 = vmatpush1.bf16.msra.mxu0 0
        %371 = vmatprep.subr.bf16.mxu0 0
        %372 = vmatpush1.bf16.msra.mxu0 0
        %373 = vmatprep.subr.bf16.mxu0 0
        %374 = vmatpush1.bf16.msra.mxu0 0
        %375 = vmatprep.subr.bf16.mxu0 0
        %376 = vmatpush1.bf16.msra.mxu0 0
        %377 = vmatprep.subr.bf16.mxu0 0
        %378 = vmatpush1.bf16.msra.mxu0 0
        %379 = vmatprep.subr.bf16.mxu0 0
        %380 = vmatpush1.bf16.msra.mxu0 0
        %381 = vmatprep.subr.bf16.mxu0 0
        %382 = vmatpush1.bf16.msra.mxu0 0
        %383 = vmatprep.subr.bf16.mxu0 0
        %384 = vmatpush1.bf16.msra.mxu0 0
        %385 = vmatprep.subr.bf16.mxu0 0
        %386 = vmatpush1.bf16.msra.mxu0 0
        %387 = vmatprep.subr.bf16.mxu0 0
        %388 = vmatpush1.bf16.msra.mxu0 0
        %389 = vmatprep.subr.bf16.mxu0 0
        %390 = vmatpush1.bf16.msra.mxu0 0
        %391 = vmatprep.subr.bf16.mxu0 0
        %392 = vmatpush1.bf16.msra.mxu0 0
        %393 = vmatprep.subr.bf16.mxu0 0
        %394 = vmatpush1.bf16.msra.mxu0 0
        %395 = vmatprep.mubr.bf16.mxu0 0
        %396 = vmatmul.mubr.bf16.gmra.mrb[0].mxu0 %v361
        %v397 = vpop.f32.mrb[0].mxu0
        %v398 = vadd.f32 0.0, %v397
        %v399 = vpop.f32.mrb[0].mxu0
        %v400 = vpop.f32.mrb[0].mxu0
        %v401 = vpop.f32.mrb[0].mxu0
        %402 = vdwg.mxu0
        %v403 = vld [vmem:[%s309] sm:$0x1]
        %v404 = vpack.c.bf16 %v398, %v398
        %406 = vrot.lane.b32.xlu0 %v404, 96
        %v407 = vpop.permute.xlu0 %406
        %vm408 = vcmask 64512
        %v410 = vsel %vm408, %v404, 0
        %v413 = vsel %vm408, %v407, 0
        %415 = vmatprep.subr.bf16.mxu0 0
        %416 = vmatpush1.bf16.xpose.msra.mxu0 %v413
        %417 = vmatprep.subr.bf16.mxu0 0
        %418 = vmatpush1.bf16.xpose.msra.mxu0 0
        %419 = vmatprep.subr.bf16.mxu0 0
        %420 = vmatpush1.bf16.xpose.msra.mxu0 0
        %421 = vmatprep.subr.bf16.mxu0 0
        %422 = vmatpush1.bf16.xpose.msra.mxu0 0
        %423 = vmatprep.subr.bf16.mxu0 0
        %424 = vmatpush1.bf16.xpose.msra.mxu0 0
        %425 = vmatprep.subr.bf16.mxu0 0
        %426 = vmatpush1.bf16.xpose.msra.mxu0 0
        %427 = vmatprep.subr.bf16.mxu0 0
        %428 = vmatpush1.bf16.xpose.msra.mxu0 0
        %429 = vmatprep.subr.bf16.mxu0 0
        %430 = vmatpush1.bf16.xpose.msra.mxu0 0
        %431 = vmatprep.subr.bf16.mxu0 0
        %432 = vmatpush1.bf16.xpose.msra.mxu0 0
        %433 = vmatprep.subr.bf16.mxu0 0
        %434 = vmatpush1.bf16.xpose.msra.mxu0 0
        %435 = vmatprep.subr.bf16.mxu0 0
        %436 = vmatpush1.bf16.xpose.msra.mxu0 0
        %437 = vmatprep.subr.bf16.mxu0 0
        %438 = vmatpush1.bf16.xpose.msra.mxu0 0
        %439 = vmatprep.subr.bf16.mxu0 0
        %440 = vmatpush1.bf16.xpose.msra.mxu0 0
        %441 = vmatprep.subr.bf16.mxu0 0
        %442 = vmatpush1.bf16.xpose.msra.mxu0 0
        %443 = vmatprep.subr.bf16.mxu0 0
        %444 = vmatpush1.bf16.xpose.msra.mxu0 0
        %445 = vmatprep.subr.bf16.mxu0 0
        %446 = vmatpush1.bf16.xpose.msra.mxu0 0
        %447 = vmatprep.mubr.bf16.mxu0 0
        %448 = vmatmul.mubr.bf16.gmra.mrb[0].mxu0 %v410
        %v449 = vpop.f32.mrb[0].mxu0
        %v450 = vadd.f32 0.0, %v449
        %v451 = vpop.f32.mrb[0].mxu0
        %v452 = vpop.f32.mrb[0].mxu0
        %v453 = vpop.f32.mrb[0].mxu0
        %454 = vdwg.mxu0
        %v455 = vmul.f32 %v450, 0.35355338
        %v457 = vlaneseq
        %v458 = vshrl.u32 %v457, 7
        %v459 = vsub.s32 0, %v458
        %v460 = vrot.slane %v403, %v459
        %v462 = vadd.f32 %v455, %v460
        %v463 = vsel %vm408, %v462, -inf
        %464 = vmax.xlane.f32.xlu0 %v463
        %v465 = vpop.xlane.xlu0 %464
        %v466 = vsub.f32 %v462, %v465
        %v467 = vmul.f32 %v466, 1.442695
        %v468 = vpow.pop %v467
        %v469 = vsel %vm408, %v468, 0.0
        %470 = vadd.xlane.f32.xlu0 %v469
        %v471 = vpop.xlane.xlu0 %470
        %v472 = vrcp.pop %v471
        %v473 = vmul.f32 %v468, %v472
        %v474 = vpack.c.bf16 %v473, %v473
        %475 = vrot.lane.b32.xlu0 %v404, 64
        %v476 = vpop.permute.xlu0 %475
        %v478 = vsel %vm408, %v474, 0
        %vm480 = vcmask 1043456
        %v482 = vsel %vm480, %v476, 0
        %484 = vmatprep.subr.bf16.mxu0 0
        %485 = vmatpush1.bf16.msra.mxu0 %v482
        %486 = vmatprep.subr.bf16.mxu0 0
        %487 = vmatpush1.bf16.msra.mxu0 0
        %488 = vmatprep.subr.bf16.mxu0 0
        %489 = vmatpush1.bf16.msra.mxu0 0
        %490 = vmatprep.subr.bf16.mxu0 0
        %491 = vmatpush1.bf16.msra.mxu0 0
        %492 = vmatprep.subr.bf16.mxu0 0
        %493 = vmatpush1.bf16.msra.mxu0 0
        %494 = vmatprep.subr.bf16.mxu0 0
        %495 = vmatpush1.bf16.msra.mxu0 0
        %496 = vmatprep.subr.bf16.mxu0 0
        %497 = vmatpush1.bf16.msra.mxu0 0
        %498 = vmatprep.subr.bf16.mxu0 0
        %499 = vmatpush1.bf16.msra.mxu0 0
        %500 = vmatprep.subr.bf16.mxu0 0
        %501 = vmatpush1.bf16.msra.mxu0 0
        %502 = vmatprep.subr.bf16.mxu0 0
        %503 = vmatpush1.bf16.msra.mxu0 0
        %504 = vmatprep.subr.bf16.mxu0 0
        %505 = vmatpush1.bf16.msra.mxu0 0
        %506 = vmatprep.subr.bf16.mxu0 0
        %507 = vmatpush1.bf16.msra.mxu0 0
        %508 = vmatprep.subr.bf16.mxu0 0
        %509 = vmatpush1.bf16.msra.mxu0 0
        %510 = vmatprep.subr.bf16.mxu0 0
        %511 = vmatpush1.bf16.msra.mxu0 0
        %512 = vmatprep.subr.bf16.mxu0 0
        %513 = vmatpush1.bf16.msra.mxu0 0
        %514 = vmatprep.subr.bf16.mxu0 0
        %515 = vmatpush1.bf16.msra.mxu0 0
        %516 = vmatprep.mubr.bf16.mxu0 0
        %517 = vmatmul.mubr.bf16.gmra.mrb[0].mxu0 %v478
        %v518 = vpop.f32.mrb[0].mxu0
        %v519 = vadd.f32 0.0, %v518
        %v520 = vpop.f32.mrb[0].mxu0
        %v521 = vpop.f32.mrb[0].mxu0
        %v522 = vpop.f32.mrb[0].mxu0
        %523 = vdwg.mxu0
        %524 = vrot.lane.b32.xlu0 %v404, 120
        %v525 = vpop.permute.xlu0 %524
        %526 = vrot.lane.b32.xlu0 %v404, 88
        %v527 = vpop.permute.xlu0 %526
        %v529 = vsel %vm408, %v525, 0
        %v532 = vsel %vm408, %v527, 0
        %534 = vmatprep.subr.bf16.mxu0 0
        %535 = vmatpush1.bf16.xpose.msra.mxu0 %v532
        %536 = vmatprep.subr.bf16.mxu0 0
        %537 = vmatpush1.bf16.xpose.msra.mxu0 0
        %538 = vmatprep.subr.bf16.mxu0 0
        %539 = vmatpush1.bf16.xpose.msra.mxu0 0
        %540 = vmatprep.subr.bf16.mxu0 0
        %541 = vmatpush1.bf16.xpose.msra.mxu0 0
        %542 = vmatprep.subr.bf16.mxu0 0
        %543 = vmatpush1.bf16.xpose.msra.mxu0 0
        %544 = vmatprep.subr.bf16.mxu0 0
        %545 = vmatpush1.bf16.xpose.msra.mxu0 0
        %546 = vmatprep.subr.bf16.mxu0 0
        %547 = vmatpush1.bf16.xpose.msra.mxu0 0
        %548 = vmatprep.subr.bf16.mxu0 0
        %549 = vmatpush1.bf16.xpose.msra.mxu0 0
        %550 = vmatprep.subr.bf16.mxu0 0
        %551 = vmatpush1.bf16.xpose.msra.mxu0 0
        %552 = vmatprep.subr.bf16.mxu0 0
        %553 = vmatpush1.bf16.xpose.msra.mxu0 0
        %554 = vmatprep.subr.bf16.mxu0 0
        %555 = vmatpush1.bf16.xpose.msra.mxu0 0
        %556 = vmatprep.subr.bf16.mxu0 0
        %557 = vmatpush1.bf16.xpose.msra.mxu0 0
        %558 = vmatprep.subr.bf16.mxu0 0
        %559 = vmatpush1.bf16.xpose.msra.mxu0 0
        %560 = vmatprep.subr.bf16.mxu0 0
        %561 = vmatpush1.bf16.xpose.msra.mxu0 0
        %562 = vmatprep.subr.bf16.mxu0 0
        %563 = vmatpush1.bf16.xpose.msra.mxu0 0
        %564 = vmatprep.subr.bf16.mxu0 0
        %565 = vmatpush1.bf16.xpose.msra.mxu0 0
        %566 = vmatprep.mubr.bf16.mxu0 0
        %567 = vmatmul.mubr.bf16.gmra.mrb[0].mxu0 %v529
        %v568 = vpop.f32.mrb[0].mxu0
        %v569 = vadd.f32 0.0, %v568
        %v570 = vpop.f32.mrb[0].mxu0
        %v571 = vpop.f32.mrb[0].mxu0
        %v572 = vpop.f32.mrb[0].mxu0
        %573 = vdwg.mxu0
        %v574 = vmul.f32 %v569, 0.35355338
        %v575 = vadd.f32 %v574, %v460
        %v576 = vsel %vm408, %v575, -inf
        %577 = vmax.xlane.f32.xlu0 %v576
        %v578 = vpop.xlane.xlu0 %577
        %v579 = vsub.f32 %v575, %v578
        %v580 = vmul.f32 %v579, 1.442695
        %v581 = vpow.pop %v580
        %v582 = vsel %vm408, %v581, 0.0
        %583 = vadd.xlane.f32.xlu0 %v582
        %v584 = vpop.xlane.xlu0 %583
        %v585 = vrcp.pop %v584
        %v586 = vmul.f32 %v581, %v585
        %v587 = vpack.c.bf16 %v586, %v586
        %588 = vrot.lane.b32.xlu0 %v404, 56
        %v589 = vpop.permute.xlu0 %588
        %v591 = vsel %vm408, %v587, 0
        %v594 = vsel %vm480, %v589, 0
        %596 = vmatprep.subr.bf16.mxu0 0
        %597 = vmatpush1.bf16.msra.mxu0 %v594
        %598 = vmatprep.subr.bf16.mxu0 0
        %599 = vmatpush1.bf16.msra.mxu0 0
        %600 = vmatprep.subr.bf16.mxu0 0
        %601 = vmatpush1.bf16.msra.mxu0 0
        %602 = vmatprep.subr.bf16.mxu0 0
        %603 = vmatpush1.bf16.msra.mxu0 0
        %604 = vmatprep.subr.bf16.mxu0 0
        %605 = vmatpush1.bf16.msra.mxu0 0
        %606 = vmatprep.subr.bf16.mxu0 0
        %607 = vmatpush1.bf16.msra.mxu0 0
        %608 = vmatprep.subr.bf16.mxu0 0
        %609 = vmatpush1.bf16.msra.mxu0 0
        %610 = vmatprep.subr.bf16.mxu0 0
        %611 = vmatpush1.bf16.msra.mxu0 0
        %612 = vmatprep.subr.bf16.mxu0 0
        %613 = vmatpush1.bf16.msra.mxu0 0
        %614 = vmatprep.subr.bf16.mxu0 0
        %615 = vmatpush1.bf16.msra.mxu0 0
        %616 = vmatprep.subr.bf16.mxu0 0
        %617 = vmatpush1.bf16.msra.mxu0 0
        %618 = vmatprep.subr.bf16.mxu0 0
        %619 = vmatpush1.bf16.msra.mxu0 0
        %620 = vmatprep.subr.bf16.mxu0 0
        %621 = vmatpush1.bf16.msra.mxu0 0
        %622 = vmatprep.subr.bf16.mxu0 0
        %623 = vmatpush1.bf16.msra.mxu0 0
        %624 = vmatprep.subr.bf16.mxu0 0
        %625 = vmatpush1.bf16.msra.mxu0 0
        %626 = vmatprep.subr.bf16.mxu0 0
        %627 = vmatpush1.bf16.msra.mxu0 0
        %628 = vmatprep.mubr.bf16.mxu0 0
        %629 = vmatmul.mubr.bf16.gmra.mrb[0].mxu0 %v591
        %v630 = vpop.f32.mrb[0].mxu0
        %v631 = vadd.f32 0.0, %v630
        %v632 = vpop.f32.mrb[0].mxu0
        %v633 = vpop.f32.mrb[0].mxu0
        %v634 = vpop.f32.mrb[0].mxu0
        %635 = vdwg.mxu0
        %636 = vrot.lane.b32.xlu0 %v404, 112
        %v637 = vpop.permute.xlu0 %636
        %638 = vrot.lane.b32.xlu0 %v404, 80
        %v639 = vpop.permute.xlu0 %638
        %v641 = vsel %vm408, %v637, 0
        %v644 = vsel %vm408, %v639, 0
        %646 = vmatprep.subr.bf16.mxu0 0
        %647 = vmatpush1.bf16.xpose.msra.mxu0 %v644
        %648 = vmatprep.subr.bf16.mxu0 0
        %649 = vmatpush1.bf16.xpose.msra.mxu0 0
        %650 = vmatprep.subr.bf16.mxu0 0
        %651 = vmatpush1.bf16.xpose.msra.mxu0 0
        %652 = vmatprep.subr.bf16.mxu0 0
        %653 = vmatpush1.bf16.xpose.msra.mxu0 0
        %654 = vmatprep.subr.bf16.mxu0 0
        %655 = vmatpush1.bf16.xpose.msra.mxu0 0
        %656 = vmatprep.subr.bf16.mxu0 0
        %657 = vmatpush1.bf16.xpose.msra.mxu0 0
        %658 = vmatprep.subr.bf16.mxu0 0
        %659 = vmatpush1.bf16.xpose.msra.mxu0 0
        %660 = vmatprep.subr.bf16.mxu0 0
        %661 = vmatpush1.bf16.xpose.msra.mxu0 0
        %662 = vmatprep.subr.bf16.mxu0 0
        %663 = vmatpush1.bf16.xpose.msra.mxu0 0
        %664 = vmatprep.subr.bf16.mxu0 0
        %665 = vmatpush1.bf16.xpose.msra.mxu0 0
        %666 = vmatprep.subr.bf16.mxu0 0
        %667 = vmatpush1.bf16.xpose.msra.mxu0 0
        %668 = vmatprep.subr.bf16.mxu0 0
        %669 = vmatpush1.bf16.xpose.msra.mxu0 0
        %670 = vmatprep.subr.bf16.mxu0 0
        %671 = vmatpush1.bf16.xpose.msra.mxu0 0
        %672 = vmatprep.subr.bf16.mxu0 0
        %673 = vmatpush1.bf16.xpose.msra.mxu0 0
        %674 = vmatprep.subr.bf16.mxu0 0
        %675 = vmatpush1.bf16.xpose.msra.mxu0 0
        %676 = vmatprep.subr.bf16.mxu0 0
        %677 = vmatpush1.bf16.xpose.msra.mxu0 0
        %678 = vmatprep.mubr.bf16.mxu0 0
        %679 = vmatmul.mubr.bf16.gmra.mrb[0].mxu0 %v641
        %v680 = vpop.f32.mrb[0].mxu0
        %v681 = vadd.f32 0.0, %v680
        %v682 = vpop.f32.mrb[0].mxu0
        %v683 = vpop.f32.mrb[0].mxu0
        %v684 = vpop.f32.mrb[0].mxu0
        %685 = vdwg.mxu0
        %v686 = vmul.f32 %v681, 0.35355338
        %v687 = vadd.f32 %v686, %v460
        %v688 = vsel %vm408, %v687, -inf
        %689 = vmax.xlane.f32.xlu0 %v688
        %v690 = vpop.xlane.xlu0 %689
        %v691 = vsub.f32 %v687, %v690
        %v692 = vmul.f32 %v691, 1.442695
        %v693 = vpow.pop %v692
        %v694 = vsel %vm408, %v693, 0.0
        %695 = vadd.xlane.f32.xlu0 %v694
        %v696 = vpop.xlane.xlu0 %695
        %v697 = vrcp.pop %v696
        %v698 = vmul.f32 %v693, %v697
        %v699 = vpack.c.bf16 %v698, %v698
        %700 = vrot.lane.b32.xlu0 %v404, 48
        %v701 = vpop.permute.xlu0 %700
        %v703 = vsel %vm408, %v699, 0
        %v706 = vsel %vm480, %v701, 0
        %708 = vmatprep.subr.bf16.mxu0 0
        %709 = vmatpush1.bf16.msra.mxu0 %v706
        %710 = vmatprep.subr.bf16.mxu0 0
        %711 = vmatpush1.bf16.msra.mxu0 0
        %712 = vmatprep.subr.bf16.mxu0 0
        %713 = vmatpush1.bf16.msra.mxu0 0
        %714 = vmatprep.subr.bf16.mxu0 0
        %715 = vmatpush1.bf16.msra.mxu0 0
        %716 = vmatprep.subr.bf16.mxu0 0
        %717 = vmatpush1.bf16.msra.mxu0 0
        %718 = vmatprep.subr.bf16.mxu0 0
        %719 = vmatpush1.bf16.msra.mxu0 0
        %720 = vmatprep.subr.bf16.mxu0 0
        %721 = vmatpush1.bf16.msra.mxu0 0
        %722 = vmatprep.subr.bf16.mxu0 0
        %723 = vmatpush1.bf16.msra.mxu0 0
        %724 = vmatprep.subr.bf16.mxu0 0
        %725 = vmatpush1.bf16.msra.mxu0 0
        %726 = vmatprep.subr.bf16.mxu0 0
        %727 = vmatpush1.bf16.msra.mxu0 0
        %728 = vmatprep.subr.bf16.mxu0 0
        %729 = vmatpush1.bf16.msra.mxu0 0
        %730 = vmatprep.subr.bf16.mxu0 0
        %731 = vmatpush1.bf16.msra.mxu0 0
        %732 = vmatprep.subr.bf16.mxu0 0
        %733 = vmatpush1.bf16.msra.mxu0 0
        %734 = vmatprep.subr.bf16.mxu0 0
        %735 = vmatpush1.bf16.msra.mxu0 0
        %736 = vmatprep.subr.bf16.mxu0 0
        %737 = vmatpush1.bf16.msra.mxu0 0
        %738 = vmatprep.subr.bf16.mxu0 0
        %739 = vmatpush1.bf16.msra.mxu0 0
        %740 = vmatprep.mubr.bf16.mxu0 0
        %741 = vmatmul.mubr.bf16.gmra.mrb[0].mxu0 %v703
        %v742 = vpop.f32.mrb[0].mxu0
        %v743 = vadd.f32 0.0, %v742
        %v744 = vpop.f32.mrb[0].mxu0
        %v745 = vpop.f32.mrb[0].mxu0
        %v746 = vpop.f32.mrb[0].mxu0
        %747 = vdwg.mxu0
        %748 = vrot.lane.b32.xlu0 %v404, 104
        %v749 = vpop.permute.xlu0 %748
        %750 = vrot.lane.b32.xlu0 %v404, 72
        %v751 = vpop.permute.xlu0 %750
        %v753 = vsel %vm408, %v749, 0
        %v756 = vsel %vm408, %v751, 0
        %758 = vmatprep.subr.bf16.mxu0 0
        %759 = vmatpush1.bf16.xpose.msra.mxu0 %v756
        %760 = vmatprep.subr.bf16.mxu0 0
        %761 = vmatpush1.bf16.xpose.msra.mxu0 0
        %762 = vmatprep.subr.bf16.mxu0 0
        %763 = vmatpush1.bf16.xpose.msra.mxu0 0
        %764 = vmatprep.subr.bf16.mxu0 0
        %765 = vmatpush1.bf16.xpose.msra.mxu0 0
        %766 = vmatprep.subr.bf16.mxu0 0
        %767 = vmatpush1.bf16.xpose.msra.mxu0 0
        %768 = vmatprep.subr.bf16.mxu0 0
        %769 = vmatpush1.bf16.xpose.msra.mxu0 0
        %770 = vmatprep.subr.bf16.mxu0 0
        %771 = vmatpush1.bf16.xpose.msra.mxu0 0
        %772 = vmatprep.subr.bf16.mxu0 0
        %773 = vmatpush1.bf16.xpose.msra.mxu0 0
        %774 = vmatprep.subr.bf16.mxu0 0
        %775 = vmatpush1.bf16.xpose.msra.mxu0 0
        %776 = vmatprep.subr.bf16.mxu0 0
        %777 = vmatpush1.bf16.xpose.msra.mxu0 0
        %778 = vmatprep.subr.bf16.mxu0 0
        %779 = vmatpush1.bf16.xpose.msra.mxu0 0
        %780 = vmatprep.subr.bf16.mxu0 0
        %781 = vmatpush1.bf16.xpose.msra.mxu0 0
        %782 = vmatprep.subr.bf16.mxu0 0
        %783 = vmatpush1.bf16.xpose.msra.mxu0 0
        %784 = vmatprep.subr.bf16.mxu0 0
        %785 = vmatpush1.bf16.xpose.msra.mxu0 0
        %786 = vmatprep.subr.bf16.mxu0 0
        %787 = vmatpush1.bf16.xpose.msra.mxu0 0
        %788 = vmatprep.subr.bf16.mxu0 0
        %789 = vmatpush1.bf16.xpose.msra.mxu0 0
        %790 = vmatprep.mubr.bf16.mxu0 0
        %791 = vmatmul.mubr.bf16.gmra.mrb[0].mxu0 %v753
        %v792 = vpop.f32.mrb[0].mxu0
        %v793 = vadd.f32 0.0, %v792
        %v794 = vpop.f32.mrb[0].mxu0
        %v795 = vpop.f32.mrb[0].mxu0
        %v796 = vpop.f32.mrb[0].mxu0
        %797 = vdwg.mxu0
        %v798 = vmul.f32 %v793, 0.35355338
        %v799 = vadd.f32 %v798, %v460
        %v800 = vsel %vm408, %v799, -inf
        %801 = vmax.xlane.f32.xlu0 %v800
        %v802 = vpop.xlane.xlu0 %801
        %v803 = vsub.f32 %v799, %v802
        %v804 = vmul.f32 %v803, 1.442695
        %v805 = vpow.pop %v804
        %v806 = vsel %vm408, %v805, 0.0
        %807 = vadd.xlane.f32.xlu0 %v806
        %v808 = vpop.xlane.xlu0 %807
        %v809 = vrcp.pop %v808
        %v810 = vmul.f32 %v805, %v809
        %v811 = vpack.c.bf16 %v810, %v810
        %812 = vrot.lane.b32.xlu0 %v404, 40
        %v813 = vpop.permute.xlu0 %812
        %v815 = vsel %vm408, %v811, 0
        %v818 = vsel %vm480, %v813, 0
        %820 = vmatprep.subr.bf16.mxu0 0
        %821 = vmatpush1.bf16.msra.mxu0 %v818
        %822 = vmatprep.subr.bf16.mxu0 0
        %823 = vmatpush1.bf16.msra.mxu0 0
        %824 = vmatprep.subr.bf16.mxu0 0
        %825 = vmatpush1.bf16.msra.mxu0 0
        %826 = vmatprep.subr.bf16.mxu0 0
        %827 = vmatpush1.bf16.msra.mxu0 0
        %828 = vmatprep.subr.bf16.mxu0 0
        %829 = vmatpush1.bf16.msra.mxu0 0
        %830 = vmatprep.subr.bf16.mxu0 0
        %831 = vmatpush1.bf16.msra.mxu0 0
        %832 = vmatprep.subr.bf16.mxu0 0
        %833 = vmatpush1.bf16.msra.mxu0 0
        %834 = vmatprep.subr.bf16.mxu0 0
        %835 = vmatpush1.bf16.msra.mxu0 0
        %836 = vmatprep.subr.bf16.mxu0 0
        %837 = vmatpush1.bf16.msra.mxu0 0
        %838 = vmatprep.subr.bf16.mxu0 0
        %839 = vmatpush1.bf16.msra.mxu0 0
        %840 = vmatprep.subr.bf16.mxu0 0
        %841 = vmatpush1.bf16.msra.mxu0 0
        %842 = vmatprep.subr.bf16.mxu0 0
        %843 = vmatpush1.bf16.msra.mxu0 0
        %844 = vmatprep.subr.bf16.mxu0 0
        %845 = vmatpush1.bf16.msra.mxu0 0
        %846 = vmatprep.subr.bf16.mxu0 0
        %847 = vmatpush1.bf16.msra.mxu0 0
        %848 = vmatprep.subr.bf16.mxu0 0
        %849 = vmatpush1.bf16.msra.mxu0 0
        %850 = vmatprep.subr.bf16.mxu0 0
        %851 = vmatpush1.bf16.msra.mxu0 0
        %852 = vmatprep.mubr.bf16.mxu0 0
        %853 = vmatmul.mubr.bf16.gmra.mrb[0].mxu0 %v815
        %v854 = vpop.f32.mrb[0].mxu0
        %v855 = vadd.f32 0.0, %v854
        %v856 = vpop.f32.mrb[0].mxu0
        %v857 = vpop.f32.mrb[0].mxu0
        %v858 = vpop.f32.mrb[0].mxu0
        %859 = vdwg.mxu0
        %861 = vrot.lane.b32.xlu0 %v631, 8
        %v862 = vpop.permute.xlu0 %861
        %865 = vrot.lane.b32.xlu0 %v743, 16
        %v866 = vpop.permute.xlu0 %865
        %869 = vrot.lane.b32.xlu0 %v855, 24
        %v870 = vpop.permute.xlu0 %869
        %v872 = vsel %vm408, %v519, %v862
        %vm873 = vcmask 130048
        %v874 = vsel %vm873, %v872, %v866
        %vm875 = vcmask 195584
        %v876 = vsel %vm875, %v874, %v870
        %v877 = vpack.c.bf16 %v876, %v876
        %v878 = vld [vmem:[#allocation7] sm:$0xf]
        %v879 = vld [vmem:[#allocation7 + $0x4] sm:$0xf]
        %v880 = vld [vmem:[#allocation7 + $0x8] sm:$0xf]
        %v881 = vld [vmem:[#allocation7 + $0xc] sm:$0xf]
        %v886 = vunpack.c.l.b16 %v878
        %v887 = vunpack.c.l.b16 %v879
        %v888 = vunpack.c.l.b16 %v880
        %v889 = vunpack.c.l.b16 %v881
        %v890 = vpack.c.b16 %v887, %v886
        %v891 = vpack.c.b16 %v889, %v888
        %v895 = vsel %vm312, %v877, 0
        %897 = vmatprep.subr.bf16.mxu0 0
        %898 = vmatpush1.bf16.msra.mxu0 %v890
        %899 = vmatprep.subr.bf16.mxu0 0
        %900 = vmatpush1.bf16.msra.mxu0 %v891
        %901 = vmatprep.subr.bf16.mxu0 0
        %902 = vmatpush1.bf16.msra.mxu0 0
        %903 = vmatprep.subr.bf16.mxu0 0
        %904 = vmatpush1.bf16.msra.mxu0 0
        %905 = vmatprep.subr.bf16.mxu0 0
        %906 = vmatpush1.bf16.msra.mxu0 0
        %907 = vmatprep.subr.bf16.mxu0 0
        %908 = vmatpush1.bf16.msra.mxu0 0
        %909 = vmatprep.subr.bf16.mxu0 0
        %910 = vmatpush1.bf16.msra.mxu0 0
        %911 = vmatprep.subr.bf16.mxu0 0
        %912 = vmatpush1.bf16.msra.mxu0 0
        %913 = vmatprep.subr.bf16.mxu0 0
        %914 = vmatpush1.bf16.msra.mxu0 0
        %915 = vmatprep.subr.bf16.mxu0 0
        %916 = vmatpush1.bf16.msra.mxu0 0
        %917 = vmatprep.subr.bf16.mxu0 0
        %918 = vmatpush1.bf16.msra.mxu0 0
        %919 = vmatprep.subr.bf16.mxu0 0
        %920 = vmatpush1.bf16.msra.mxu0 0
        %921 = vmatprep.subr.bf16.mxu0 0
        %922 = vmatpush1.bf16.msra.mxu0 0
        %923 = vmatprep.subr.bf16.mxu0 0
        %924 = vmatpush1.bf16.msra.mxu0 0
        %925 = vmatprep.subr.bf16.mxu0 0
        %926 = vmatpush1.bf16.msra.mxu0 0
        %927 = vmatprep.subr.bf16.mxu0 0
        %928 = vmatpush1.bf16.msra.mxu0 0
        %929 = vmatprep.mubr.bf16.mxu0 0
        %930 = vmatmul.mubr.bf16.gmra.mrb[0].mxu0 %v895
        %v931 = vpop.f32.mrb[0].mxu0
        %v932 = vadd.f32 0.0, %v931
        %v933 = vpop.f32.mrb[0].mxu0
        %v934 = vpop.f32.mrb[0].mxu0
        %v935 = vpop.f32.mrb[0].mxu0
        %936 = vdwg.mxu0
        %v937 = vadd.f32 %v311, %v932
        %938 = vst.msk [vmem:[%s306] sm:$0xff] %vm312, %v937
        %s939 = sand.u32 %s168, 1
        %s940 = scalar_lea.sflag [#allocation4], %s939
        %s941 = sand.u32 %s168, 1
        %s942 = smul.addr %s941, 8
        %s943 = scalar_lea.vmem [#allocation8], %s942
        // Predicated region
        $region57: #{tpu_custom_call.1} parent=43 // pred_check
          %p944 = pneg %p178
        $region58: #{tpu_custom_call.1} parent=43 // pred_check_branch
          %946 = sbr.rel (%p944) target = $region60
        $region59: #{tpu_custom_call.1} parent=43 // pred_region
          %s948 = ssub.s32 128, 128
          %949 = vsyncadd %s940, %s948
          %s950 = smul.addr %s24, 128
          %s951 = scalar_lea.hbm %s6, %s950
          %s953 = sshll.u32 %s943, 4
          %s954 = int_to_ptr.vmem [resolvable:$true] %s953
          %956 = dma.vmem_to_hbm [thread:$0]  %s954, 128, %s951, %s940
        $region60: #{tpu_custom_call.1} parent=43 // pred_fallthru
          _
      $region44: #{tpu_custom_call.1} parent=5 // pred_fallthru
        _
      %p957 = scmp.le.s32.totalorder 2, %s19
      // Predicated region
      $region61: #{tpu_custom_call.1} parent=5 // pred_check
        %p958 = pneg %p957
      $region62: #{tpu_custom_call.1} parent=5 // pred_check_branch
        %960 = sbr.rel (%p958) target = $region64
      $region63: #{tpu_custom_call.1} parent=5 // pred_region
        %s961 = ssub.s32 %s19, 2
        // Predicated region
        $region65: #{tpu_custom_call.1} parent=63 // pred_check
          %p962 = pneg %p184
        $region66: #{tpu_custom_call.1} parent=63 // pred_check_branch
          %964 = sbr.rel (%p962) target = $region68
        $region67: #{tpu_custom_call.1} parent=63 // pred_region
          %s965 = sand.u32 %s169, 1
          %s966 = scalar_lea.sflag [#allocation4], %s965
          %s967 = sand.u32 %s169, 1
          %s968 = smul.addr %s967, 8
          %s969 = scalar_lea.vmem [#allocation8], %s968
          %970 = dma.done %s966, 128
        $region68: #{tpu_custom_call.1} parent=63 // pred_fallthru
          _
      $region64: #{tpu_custom_call.1} parent=5 // pred_fallthru
        _
    $region6: #{tpu_custom_call.1} parent=1 // loop_footer
      %s23 = sadd.s32 1, %s19
    $region7: #{tpu_custom_call.1} parent=1 // loop_footer_branch
      %18 = sbr.rel target = $region3
    $region8: #{tpu_custom_call.1} parent=1 // loop_exit
      _
    %971 = vsyncpa [#allocation3], 1
    %s972 = scalar_lea.sflag [#allocation3], 1
    %973 = vsyncpa %s972, 1
    %974 = vsyncpa [#allocation6], 1
    %975 = vsyncpa [#allocation4], 1
    %s976 = scalar_lea.sflag [#allocation4], 1
    %977 = vsyncpa %s976, 1

</llo_original>
